<compile_context>
chip_gen: v7x
topology: tpu7x:2x2x1
jax: 0.10.0
libtpu: 0.0.40
codegen_flags: <defaults>
</compile_context>

<pallas_src>
import functools

import jax
import jax.numpy as jnp
import numpy as np
from jax.experimental import pallas as pl
from jax.experimental.pallas import tpu as pltpu

EPS = 1e-5                     # PyTorch GroupNorm default eps
_INV_SQRT2 = 0.7071067811865476
_LANE = 128                    # vreg lane width
_SUB_BF16 = 16                 # native bf16 sublane tile (aligned channel concatenation)


def _round_up(a, m):
    return (a + m - 1) // m * m


def _gelu_exact(x):
    # Exact (erf-based) GELU, matching torch.nn.functional.gelu default.
    return 0.5 * x * (1.0 + jax.lax.erf(x * _INV_SQRT2))


def _double_conv_kernel(x_ref, w1_ref, w2_ref, g1_ref, b1_ref, g2_ref, b2_ref,
                        mask_ref, o_ref, *, dims, n_mid, n_out, residual):
    """One batch sample per grid step; everything stays VMEM/vreg resident between stages.

    x_ref:    (1, Cin_p, Lx)      bf16 input, channel-padded, spatially zero-padded by 2,
                                  flattened and tail-padded to Lx (multiple of 128)
    w1_ref:   (Cmid_p, 9*Cin_p)   conv1 weights, tap-major/channel-minor columns, bf16
    w2_ref:   (Cout,   9*Cmid_p)  conv2 weights, bf16
    g*/b*:    (C, 1)              GroupNorm affine params, f32 (padded rows are zero)
    mask_ref: (1, Lx)             1.0 at the H*W real pixels of the padded flat layout
    o_ref:    (1, Cout, Lout)     channel-major output; lane j = r*Wp + c for pixel (r, c)
    """
    H, W, L1 = dims
    Wp = W + 4
    M = Wp + 1                    # margin: every 3x3 tap is an in-bounds lane slice
    Lout = o_ref.shape[-1]
    Cmid_p = w1_ref.shape[0]

    x = x_ref[0]                                     # (Cin_p, Lx) bf16 (cast-once: none needed)
    mask_full = mask_ref[...]                        # (1, Lx) f32
    mask1 = mask_full[:, M:M + L1]                   # interior mask, conv1-window coords
    mask2 = mask_full[:, 2 * M:2 * M + Lout]         # interior mask, conv2-window coords

    def conv3x3(src, w_ref, out_len):
        # src: (Ci_p, src_len) bf16.  Single K = 9*Ci_p MXU contraction: the 9 taps are
        # static contiguous lane slices concatenated along the (tile-aligned) channel axis.
        taps = []
        for kh in range(3):
            for kw in range(3):
                start = M + (kh - 1) * Wp + (kw - 1)
                taps.append(src[:, start:start + out_len])
        patch = jnp.concatenate(taps, axis=0)        # (9*Ci_p, out_len) bf16
        return jnp.dot(w_ref[...], patch, preferred_element_type=jnp.float32)

    def group_norm1(acc, mask, g, b, n_true, pad_pixels):
        # GroupNorm(num_groups=1): stats over all true channels and the valid H*W pixels.
        # Mean: padded-channel rows of acc are exactly zero (zero weight rows) so they
        # drop out of the masked sum.  Variance: centered two-pass form (no E[x^2]-E[x]^2
        # cancellation) plus an exact scalar correction removing the (-mean)^2
        # contribution of the zero padded-channel rows.
        am = acc * mask
        mean = jnp.sum(jnp.sum(am, axis=1, keepdims=True)) / n_true     # lane-first reduce
        xcm = (acc - mean) * mask
        var = jnp.sum(jnp.sum(xcm * xcm, axis=1, keepdims=True)) / n_true
        if pad_pixels:
            var = var - mean * mean * (float(pad_pixels) / n_true)
        inv = jax.lax.rsqrt(jnp.maximum(var, 0.0) + EPS)
        # Uses xcm (not acc-mean): differs only where mask==0, which is either re-zeroed
        # (stage 1) or discarded by the wrapper slice (stage 2).
        return xcm * (inv * g) + b

    # --- Conv1 + GroupNorm(1, Cmid) + GELU ---
    n1 = float(n_mid * H * W)
    acc1 = conv3x3(x, w1_ref, L1)                                        # (Cmid_p, L1) f32
    gn1 = group_norm1(acc1, mask1, g1_ref[...], b1_ref[...], n1,
                      (Cmid_p - n_mid) * H * W)
    # Zero outside the interior == conv2's zero-padding ring; cast to bf16 ONCE.
    y1 = (_gelu_exact(gn1) * mask1).astype(jnp.bfloat16)

    # --- Conv2 + GroupNorm(1, Cout) (+ residual GELU) ---
    n2 = float(n_out * H * W)
    acc2 = conv3x3(y1, w2_ref, Lout)                                     # (Cout, Lout) f32
    y2 = group_norm1(acc2, mask2, g2_ref[...], b2_ref[...], n2, 0)
    if residual:
        # Residual reuses the input block already resident in VMEM (no extra HBM stream).
        xr = x[:n_out, 2 * M:2 * M + Lout].astype(jnp.float32)
        y2 = _gelu_exact(xr + y2)
    o_ref[0] = y2.astype(o_ref.dtype)


def double_convolution(x_nchw, params, *, residual=False):
    """Forward pass of DoubleConvolution. Input/output are NCHW like PyTorch."""
    N, Cin, H, W = x_nchw.shape
    Hp, Wp = H + 4, W + 4
    L_full = Hp * Wp
    M = Wp + 1

    w1, w2 = params["w1"], params["w2"]
    Cmid, Cout = w1.shape[0], w2.shape[0]
    if residual:
        assert Cin == Cout, "residual mode requires in_channels == out_channels"

    # Pad the CONTRACTED channel dims to the bf16 sublane tile for aligned concatenation.
    Cin_p = _round_up(Cin, _SUB_BF16)
    Cmid_p = _round_up(Cmid, _SUB_BF16)

    # Lane-dense extents (all multiples of 128 -> unmasked loads/stores).
    Lout = _round_up(H * Wp, _LANE)       # conv2/output window; lanes [0, H*Wp) are real
    L1 = _round_up(Lout + 2 * M, _LANE)   # conv1 window (covers every conv2 tap slice)
    Lx = _round_up(L1 + 2 * M, _LANE)     # padded+flattened input length (>= Hp*Wp)

    # Input: bf16 HBM stream; pad channels, pad spatially by 2, flatten, pad tail lanes.
    x = x_nchw.astype(jnp.bfloat16)
    xp = jnp.pad(x, ((0, 0), (0, Cin_p - Cin), (2, 2), (2, 2))).reshape(N, Cin_p, L_full)
    xp = jnp.pad(xp, ((0, 0), (0, 0), (0, Lx - L_full)))

    # Conv weights as ONE (Cout, 9*Ci_p) matmul operand per conv: columns ordered
    # tap-major / channel-minor to match the in-kernel patch concatenation; bf16 for MXU.
    w1p = jnp.pad(w1, ((0, Cmid_p - Cmid), (0, Cin_p - Cin), (0, 0), (0, 0)))
    w2p = jnp.pad(w2, ((0, 0), (0, Cmid_p - Cmid), (0, 0), (0, 0)))
    w1m = jnp.transpose(w1p, (0, 2, 3, 1)).reshape(Cmid_p, 9 * Cin_p).astype(jnp.bfloat16)
    w2m = jnp.transpose(w2p, (0, 2, 3, 1)).reshape(Cout, 9 * Cmid_p).astype(jnp.bfloat16)

    g1 = jnp.pad(params["g1"], (0, Cmid_p - Cmid)).reshape(Cmid_p, 1).astype(jnp.float32)
    b1 = jnp.pad(params["b1"], (0, Cmid_p - Cmid)).reshape(Cmid_p, 1).astype(jnp.float32)
    g2 = params["g2"].reshape(Cout, 1).astype(jnp.float32)
    b2 = params["b2"].reshape(Cout, 1).astype(jnp.float32)

    # 1.0 at the H*W real pixels of the padded flat layout (rows/cols 2..+H/+W), else 0.
    pos = jnp.arange(Lx)
    rr, cc = pos // Wp, pos % Wp
    interior = (rr >= 2) & (rr < H + 2) & (cc >= 2) & (cc < W + 2) & (pos < L_full)
    mask_full = interior.astype(jnp.float32).reshape(1, Lx)

    kernel = functools.partial(_double_conv_kernel, dims=(H, W, L1),
                               n_mid=Cmid, n_out=Cout, residual=residual)

    out_core = pl.pallas_call(
        kernel,
        out_shape=jax.ShapeDtypeStruct((N, Cout, Lout), jnp.float32),
        grid=(N,),  # one sample per step; parallel batch axis feeds both v7x TensorCores
        in_specs=[
            pl.BlockSpec((1, Cin_p, Lx), lambda b: (b, 0, 0)),
            pl.BlockSpec((Cmid_p, 9 * Cin_p), lambda b: (0, 0)),
            pl.BlockSpec((Cout, 9 * Cmid_p), lambda b: (0, 0)),
            pl.BlockSpec((Cmid_p, 1), lambda b: (0, 0)),
            pl.BlockSpec((Cmid_p, 1), lambda b: (0, 0)),
            pl.BlockSpec((Cout, 1), lambda b: (0, 0)),
            pl.BlockSpec((Cout, 1), lambda b: (0, 0)),
            pl.BlockSpec((1, Lx), lambda b: (0, 0)),
        ],
        out_specs=pl.BlockSpec((1, Cout, Lout), lambda b: (b, 0, 0)),
        compiler_params=pltpu.CompilerParams(
            dimension_semantics=("parallel",),
            # Plenty for these shapes; raise toward 64-96 MiB on v5e/v6e for bigger
            # channel/spatial configs (keep <= ~32 MiB per step on v7x's 64 MiB VMEM).
            vmem_limit_bytes=32 * 1024 * 1024,
        ),
    )(xp, w1m, w2m, g1, b1, g2, b2, mask_full)

    # Cheap epilogue: output lane j = r*Wp + c for real pixel (r, c); tail lanes discarded.
    out = out_core[:, :, :H * Wp].reshape(N, Cout, H, Wp)[:, :, :, :W]
    return out


# ---------------- pure-JAX reference (for correctness check) ----------------
def _reference(x_nchw, params, *, residual=False):
    def conv(x, w):
        return jax.lax.conv_general_dilated(
            x, w, window_strides=(1, 1), padding=((1, 1), (1, 1)),
            dimension_numbers=("NCHW", "OIHW", "NCHW"))

    def gn(x, g, b):
        mean = jnp.mean(x, axis=(1, 2, 3), keepdims=True)
        var = jnp.mean((x - mean) ** 2, axis=(1, 2, 3), keepdims=True)
        xn = (x - mean) * jax.lax.rsqrt(var + EPS)
        return xn * g[None, :, None, None] + b[None, :, None, None]

    h = gn(conv(x_nchw, params["w1"]), params["g1"], params["b1"])
    h = jax.nn.gelu(h, approximate=False)
    h = gn(conv(h, params["w2"]), params["g2"], params["b2"])
    if residual:
        return jax.nn.gelu(x_nchw + h, approximate=False)
    return h


def _make_params(key, in_ch, out_ch, additional_ch=None):
    if not additional_ch:
        additional_ch = out_ch
    k1, k2, k3, k4, k5, k6 = jax.random.split(key, 6)
    return {
        # Conv2d weights (bias=False): (Cout, Cin, 3, 3)
        "w1": 0.2 * jax.random.normal(k1, (additional_ch, in_ch, 3, 3), jnp.float32),
        "w2": 0.2 * jax.random.normal(k2, (out_ch, additional_ch, 3, 3), jnp.float32),
        # GroupNorm affine params (randomized but deterministic, to exercise the path)
        "g1": 1.0 + 0.1 * jax.random.normal(k3, (additional_ch,), jnp.float32),
        "b1": 0.1 * jax.random.normal(k4, (additional_ch,), jnp.float32),
        "g2": 1.0 + 0.1 * jax.random.normal(k5, (out_ch,), jnp.float32),
        "b2": 0.1 * jax.random.normal(k6, (out_ch,), jnp.float32),
    }


if __name__ == "__main__":
    key = jax.random.PRNGKey(0)
    kx, kp1, kp2 = jax.random.split(key, 3)

    N, H, W = 2, 16, 16

    # Case 1: non-residual, in_channels=4 -> out_channels=8 (exercises channel padding)
    x1 = jax.random.normal(kx, (N, 4, H, W), jnp.float32)
    params1 = _make_params(kp1, in_ch=4, out_ch=8)
    out1 = jax.block_until_ready(double_convolution(x1, params1, residual=False))
    ref1 = _reference(x1, params1, residual=False)
    np.testing.assert_allclose(np.asarray(out1), np.asarray(ref1), rtol=2e-2, atol=2e-2)

    # Case 2: residual mode, in_channels = out_channels = 4
    params2 = _make_params(kp2, in_ch=4, out_ch=4)
    out2 = jax.block_until_ready(double_convolution(x1, params2, residual=True))
    ref2 = _reference(x1, params2, residual=True)
    np.testing.assert_allclose(np.asarray(out2), np.asarray(ref2), rtol=2e-2, atol=2e-2)

    print("KERNEL_OK")
</pallas_src>

<mosaic_0001>
module attributes {stable_mosaic.version = 11 : i64} {
  func.func @_double_conv_kernel(%arg0: i32, %arg1: memref<1x16x640xbf16, #tpu.memory_space<vmem>>, %arg2: memref<16x144xbf16, #tpu.memory_space<vmem>>, %arg3: memref<8x144xbf16, #tpu.memory_space<vmem>>, %arg4: memref<16x1xf32, #tpu.memory_space<vmem>>, %arg5: memref<16x1xf32, #tpu.memory_space<vmem>>, %arg6: memref<8x1xf32, #tpu.memory_space<vmem>>, %arg7: memref<8x1xf32, #tpu.memory_space<vmem>>, %arg8: memref<1x640xf32, #tpu.memory_space<vmem>>, %arg9: memref<1x8x384xf32, #tpu.memory_space<vmem>>) attributes {dimension_semantics = [#tpu.dimension_semantics<parallel>], iteration_bounds = array<i64: 2>, scalar_prefetch = 0 : i64, scratch_operands = 0 : i64, tpu.core_type = #tpu.core_type<tc>, window_params = [{transform_indices = @transform_0, window_bounds = array<i64: 1, 16, 640>}, {pipeline_mode = #tpu.pipeline_mode<synchronous>, transform_indices = @transform_1, window_bounds = array<i64: 16, 144>}, {pipeline_mode = #tpu.pipeline_mode<synchronous>, transform_indices = @transform_2, window_bounds = array<i64: 8, 144>}, {pipeline_mode = #tpu.pipeline_mode<synchronous>, transform_indices = @transform_3, window_bounds = array<i64: 16, 1>}, {pipeline_mode = #tpu.pipeline_mode<synchronous>, transform_indices = @transform_4, window_bounds = array<i64: 16, 1>}, {pipeline_mode = #tpu.pipeline_mode<synchronous>, transform_indices = @transform_5, window_bounds = array<i64: 8, 1>}, {pipeline_mode = #tpu.pipeline_mode<synchronous>, transform_indices = @transform_6, window_bounds = array<i64: 8, 1>}, {pipeline_mode = #tpu.pipeline_mode<synchronous>, transform_indices = @transform_7, window_bounds = array<i64: 1, 640>}, {transform_indices = @transform_8, window_bounds = array<i64: 1, 8, 384>}]} {
    %c0 = arith.constant 0 : index
    %c0_0 = arith.constant 0 : index
    %c0_1 = arith.constant 0 : index
    %0 = vector.load %arg1[%c0, %c0_0, %c0_1] : memref<1x16x640xbf16, #tpu.memory_space<vmem>>, vector<1x16x640xbf16>
    %1 = vector.shape_cast %0 : vector<1x16x640xbf16> to vector<16x640xbf16>
    %c0_2 = arith.constant 0 : index
    %c0_3 = arith.constant 0 : index
    %2 = vector.load %arg8[%c0_2, %c0_3] : memref<1x640xf32, #tpu.memory_space<vmem>>, vector<1x640xf32>
    %3 = vector.extract_strided_slice %2 {offsets = [0, 21], sizes = [1, 512], strides = [1, 1]} : vector<1x640xf32> to vector<1x512xf32>
    %4 = vector.extract_strided_slice %2 {offsets = [0, 42], sizes = [1, 384], strides = [1, 1]} : vector<1x640xf32> to vector<1x384xf32>
    %5 = vector.extract_strided_slice %1 {offsets = [0, 0], sizes = [16, 512], strides = [1, 1]} : vector<16x640xbf16> to vector<16x512xbf16>
    %6 = vector.extract_strided_slice %1 {offsets = [0, 1], sizes = [16, 512], strides = [1, 1]} : vector<16x640xbf16> to vector<16x512xbf16>
    %7 = vector.extract_strided_slice %1 {offsets = [0, 2], sizes = [16, 512], strides = [1, 1]} : vector<16x640xbf16> to vector<16x512xbf16>
    %8 = vector.extract_strided_slice %1 {offsets = [0, 20], sizes = [16, 512], strides = [1, 1]} : vector<16x640xbf16> to vector<16x512xbf16>
    %9 = vector.extract_strided_slice %1 {offsets = [0, 21], sizes = [16, 512], strides = [1, 1]} : vector<16x640xbf16> to vector<16x512xbf16>
    %10 = vector.extract_strided_slice %1 {offsets = [0, 22], sizes = [16, 512], strides = [1, 1]} : vector<16x640xbf16> to vector<16x512xbf16>
    %11 = vector.extract_strided_slice %1 {offsets = [0, 40], sizes = [16, 512], strides = [1, 1]} : vector<16x640xbf16> to vector<16x512xbf16>
    %12 = vector.extract_strided_slice %1 {offsets = [0, 41], sizes = [16, 512], strides = [1, 1]} : vector<16x640xbf16> to vector<16x512xbf16>
    %13 = vector.extract_strided_slice %1 {offsets = [0, 42], sizes = [16, 512], strides = [1, 1]} : vector<16x640xbf16> to vector<16x512xbf16>
    %14 = tpu.concatenate %5, %6, %7, %8, %9, %10, %11, %12, %13 in 0 : vector<16x512xbf16>, vector<16x512xbf16>, vector<16x512xbf16>, vector<16x512xbf16>, vector<16x512xbf16>, vector<16x512xbf16>, vector<16x512xbf16>, vector<16x512xbf16>, vector<16x512xbf16> -> vector<144x512xbf16>
    %c0_4 = arith.constant 0 : index
    %c0_5 = arith.constant 0 : index
    %15 = vector.load %arg2[%c0_4, %c0_5] : memref<16x144xbf16, #tpu.memory_space<vmem>>, vector<16x144xbf16>
    %cst = arith.constant dense<0.000000e+00> : vector<16x512xf32>
    %16 = tpu.matmul %15, %14, %cst {dimension_numbers = #tpu.dot_dimension_numbers<[1], [0], [0], [1], [0, 0, 1, 1], [], []>} : vector<16x144xbf16>, vector<144x512xbf16>, vector<16x512xf32> -> vector<16x512xf32>
    %c0_6 = arith.constant 0 : index
    %c0_7 = arith.constant 0 : index
    %17 = vector.load %arg4[%c0_6, %c0_7] : memref<16x1xf32, #tpu.memory_space<vmem>>, vector<16x1xf32>
    %c0_8 = arith.constant 0 : index
    %c0_9 = arith.constant 0 : index
    %18 = vector.load %arg5[%c0_8, %c0_9] : memref<16x1xf32, #tpu.memory_space<vmem>>, vector<16x1xf32>
    %19 = vector.broadcast %3 : vector<1x512xf32> to vector<16x512xf32>
    %20 = arith.mulf %16, %19 : vector<16x512xf32>
    %cst_10 = arith.constant dense<0.000000e+00> : vector<16xf32>
    %21 = vector.multi_reduction <add>, %20, %cst_10 [1] : vector<16x512xf32> to vector<16xf32>
    %22 = vector.shape_cast %21 : vector<16xf32> to vector<16x1xf32>
    %23 = vector.shape_cast %22 : vector<16x1xf32> to vector<1x16x1xf32>
    %cst_11 = arith.constant dense<0.000000e+00> : vector<1xf32>
    %24 = vector.multi_reduction <add>, %23, %cst_11 [1, 2] : vector<1x16x1xf32> to vector<1xf32>
    %25 = vector.shape_cast %24 : vector<1xf32> to vector<1x1x1xf32>
    %26 = vector.extract %25[0, 0, 0] : f32 from vector<1x1x1xf32>
    %cst_12 = arith.constant 2.048000e+03 : f32
    %27 = arith.divf %26, %cst_12 : f32
    %28 = vector.broadcast %27 : f32 to vector<16x512xf32>
    %29 = arith.subf %16, %28 : vector<16x512xf32>
    %30 = vector.broadcast %3 : vector<1x512xf32> to vector<16x512xf32>
    %31 = arith.mulf %29, %30 : vector<16x512xf32>
    %32 = arith.mulf %31, %31 : vector<16x512xf32>
    %cst_13 = arith.constant dense<0.000000e+00> : vector<16xf32>
    %33 = vector.multi_reduction <add>, %32, %cst_13 [1] : vector<16x512xf32> to vector<16xf32>
    %34 = vector.shape_cast %33 : vector<16xf32> to vector<16x1xf32>
    %35 = vector.shape_cast %34 : vector<16x1xf32> to vector<1x16x1xf32>
    %cst_14 = arith.constant dense<0.000000e+00> : vector<1xf32>
    %36 = vector.multi_reduction <add>, %35, %cst_14 [1, 2] : vector<1x16x1xf32> to vector<1xf32>
    %37 = vector.shape_cast %36 : vector<1xf32> to vector<1x1x1xf32>
    %38 = vector.extract %37[0, 0, 0] : f32 from vector<1x1x1xf32>
    %cst_15 = arith.constant 2.048000e+03 : f32
    %39 = arith.divf %38, %cst_15 : f32
    %40 = arith.mulf %27, %27 : f32
    %cst_16 = arith.constant 1.000000e+00 : f32
    %41 = arith.mulf %40, %cst_16 : f32
    %42 = arith.subf %39, %41 : f32
    %cst_17 = arith.constant 0.000000e+00 : f32
    %43 = arith.maximumf %42, %cst_17 : f32
    %cst_18 = arith.constant 9.99999974E-6 : f32
    %44 = arith.addf %43, %cst_18 : f32
    %45 = math.rsqrt %44 : f32
    %46 = vector.broadcast %45 : f32 to vector<16x1xf32>
    %47 = arith.mulf %46, %17 : vector<16x1xf32>
    %48 = vector.broadcast %47 : vector<16x1xf32> to vector<16x512xf32>
    %49 = arith.mulf %31, %48 : vector<16x512xf32>
    %50 = vector.broadcast %18 : vector<16x1xf32> to vector<16x512xf32>
    %51 = arith.addf %49, %50 : vector<16x512xf32>
    %cst_19 = arith.constant 5.000000e-01 : f32
    %52 = vector.broadcast %cst_19 : f32 to vector<16x512xf32>
    %53 = arith.mulf %52, %51 : vector<16x512xf32>
    %cst_20 = arith.constant 0.707106769 : f32
    %54 = vector.broadcast %cst_20 : f32 to vector<16x512xf32>
    %55 = arith.mulf %51, %54 : vector<16x512xf32>
    %56 = math.erf %55 : vector<16x512xf32>
    %cst_21 = arith.constant 1.000000e+00 : f32
    %57 = vector.broadcast %cst_21 : f32 to vector<16x512xf32>
    %58 = arith.addf %57, %56 : vector<16x512xf32>
    %59 = arith.mulf %53, %58 : vector<16x512xf32>
    %60 = vector.broadcast %3 : vector<1x512xf32> to vector<16x512xf32>
    %61 = arith.mulf %59, %60 : vector<16x512xf32>
    %62 = arith.truncf %61 : vector<16x512xf32> to vector<16x512xbf16>
    %63 = vector.extract_strided_slice %62 {offsets = [0, 0], sizes = [16, 384], strides = [1, 1]} : vector<16x512xbf16> to vector<16x384xbf16>
    %64 = vector.extract_strided_slice %62 {offsets = [0, 1], sizes = [16, 384], strides = [1, 1]} : vector<16x512xbf16> to vector<16x384xbf16>
    %65 = vector.extract_strided_slice %62 {offsets = [0, 2], sizes = [16, 384], strides = [1, 1]} : vector<16x512xbf16> to vector<16x384xbf16>
    %66 = vector.extract_strided_slice %62 {offsets = [0, 20], sizes = [16, 384], strides = [1, 1]} : vector<16x512xbf16> to vector<16x384xbf16>
    %67 = vector.extract_strided_slice %62 {offsets = [0, 21], sizes = [16, 384], strides = [1, 1]} : vector<16x512xbf16> to vector<16x384xbf16>
    %68 = vector.extract_strided_slice %62 {offsets = [0, 22], sizes = [16, 384], strides = [1, 1]} : vector<16x512xbf16> to vector<16x384xbf16>
    %69 = vector.extract_strided_slice %62 {offsets = [0, 40], sizes = [16, 384], strides = [1, 1]} : vector<16x512xbf16> to vector<16x384xbf16>
    %70 = vector.extract_strided_slice %62 {offsets = [0, 41], sizes = [16, 384], strides = [1, 1]} : vector<16x512xbf16> to vector<16x384xbf16>
    %71 = vector.extract_strided_slice %62 {offsets = [0, 42], sizes = [16, 384], strides = [1, 1]} : vector<16x512xbf16> to vector<16x384xbf16>
    %72 = tpu.concatenate %63, %64, %65, %66, %67, %68, %69, %70, %71 in 0 : vector<16x384xbf16>, vector<16x384xbf16>, vector<16x384xbf16>, vector<16x384xbf16>, vector<16x384xbf16>, vector<16x384xbf16>, vector<16x384xbf16>, vector<16x384xbf16>, vector<16x384xbf16> -> vector<144x384xbf16>
    %c0_22 = arith.constant 0 : index
    %c0_23 = arith.constant 0 : index
    %73 = vector.load %arg3[%c0_22, %c0_23] : memref<8x144xbf16, #tpu.memory_space<vmem>>, vector<8x144xbf16>
    %cst_24 = arith.constant dense<0.000000e+00> : vector<8x384xf32>
    %74 = tpu.matmul %73, %72, %cst_24 {dimension_numbers = #tpu.dot_dimension_numbers<[1], [0], [0], [1], [0, 0, 1, 1], [], []>} : vector<8x144xbf16>, vector<144x384xbf16>, vector<8x384xf32> -> vector<8x384xf32>
    %c0_25 = arith.constant 0 : index
    %c0_26 = arith.constant 0 : index
    %75 = vector.load %arg6[%c0_25, %c0_26] : memref<8x1xf32, #tpu.memory_space<vmem>>, vector<8x1xf32>
    %c0_27 = arith.constant 0 : index
    %c0_28 = arith.constant 0 : index
    %76 = vector.load %arg7[%c0_27, %c0_28] : memref<8x1xf32, #tpu.memory_space<vmem>>, vector<8x1xf32>
    %77 = vector.broadcast %4 : vector<1x384xf32> to vector<8x384xf32>
    %78 = arith.mulf %74, %77 : vector<8x384xf32>
    %cst_29 = arith.constant dense<0.000000e+00> : vector<8xf32>
    %79 = vector.multi_reduction <add>, %78, %cst_29 [1] : vector<8x384xf32> to vector<8xf32>
    %80 = vector.shape_cast %79 : vector<8xf32> to vector<8x1xf32>
    %81 = vector.shape_cast %80 : vector<8x1xf32> to vector<1x8x1xf32>
    %cst_30 = arith.constant dense<0.000000e+00> : vector<1xf32>
    %82 = vector.multi_reduction <add>, %81, %cst_30 [1, 2] : vector<1x8x1xf32> to vector<1xf32>
    %83 = vector.shape_cast %82 : vector<1xf32> to vector<1x1x1xf32>
    %84 = vector.extract %83[0, 0, 0] : f32 from vector<1x1x1xf32>
    %cst_31 = arith.constant 2.048000e+03 : f32
    %85 = arith.divf %84, %cst_31 : f32
    %86 = vector.broadcast %85 : f32 to vector<8x384xf32>
    %87 = arith.subf %74, %86 : vector<8x384xf32>
    %88 = vector.broadcast %4 : vector<1x384xf32> to vector<8x384xf32>
    %89 = arith.mulf %87, %88 : vector<8x384xf32>
    %90 = arith.mulf %89, %89 : vector<8x384xf32>
    %cst_32 = arith.constant dense<0.000000e+00> : vector<8xf32>
    %91 = vector.multi_reduction <add>, %90, %cst_32 [1] : vector<8x384xf32> to vector<8xf32>
    %92 = vector.shape_cast %91 : vector<8xf32> to vector<8x1xf32>
    %93 = vector.shape_cast %92 : vector<8x1xf32> to vector<1x8x1xf32>
    %cst_33 = arith.constant dense<0.000000e+00> : vector<1xf32>
    %94 = vector.multi_reduction <add>, %93, %cst_33 [1, 2] : vector<1x8x1xf32> to vector<1xf32>
    %95 = vector.shape_cast %94 : vector<1xf32> to vector<1x1x1xf32>
    %96 = vector.extract %95[0, 0, 0] : f32 from vector<1x1x1xf32>
    %cst_34 = arith.constant 2.048000e+03 : f32
    %97 = arith.divf %96, %cst_34 : f32
    %cst_35 = arith.constant 0.000000e+00 : f32
    %98 = arith.maximumf %97, %cst_35 : f32
    %cst_36 = arith.constant 9.99999974E-6 : f32
    %99 = arith.addf %98, %cst_36 : f32
    %100 = math.rsqrt %99 : f32
    %101 = vector.broadcast %100 : f32 to vector<8x1xf32>
    %102 = arith.mulf %101, %75 : vector<8x1xf32>
    %103 = vector.broadcast %102 : vector<8x1xf32> to vector<8x384xf32>
    %104 = arith.mulf %89, %103 : vector<8x384xf32>
    %105 = vector.broadcast %76 : vector<8x1xf32> to vector<8x384xf32>
    %106 = arith.addf %104, %105 : vector<8x384xf32>
    %c0_37 = arith.constant 0 : index
    %c0_38 = arith.constant 0 : index
    %c0_39 = arith.constant 0 : index
    %107 = vector.load %arg9[%c0_37, %c0_38, %c0_39] : memref<1x8x384xf32, #tpu.memory_space<vmem>>, vector<1x8x384xf32>
    %108 = vector.shape_cast %107 : vector<1x8x384xf32> to vector<8x384xf32>
    %109 = vector.shape_cast %106 : vector<8x384xf32> to vector<1x8x384xf32>
    tpu.vector_store %arg9[%c0_37, %c0_38, %c0_39], %109 {strides = array<i32>} : memref<1x8x384xf32, #tpu.memory_space<vmem>>, vector<1x8x384xf32>,
    return
  }
  func.func @transform_0(%arg0: i32) -> (i32, i32, i32) {
    %c0_i32 = arith.constant 0 : i32
    %c0_i32_0 = arith.constant 0 : i32
    %c0_i32_1 = arith.constant 0 : i32
    return %arg0, %c0_i32, %c0_i32_0 : i32, i32, i32
  }
  func.func @transform_1(%arg0: i32) -> (i32, i32) {
    %c0_i32 = arith.constant 0 : i32
    %c0_i32_0 = arith.constant 0 : i32
    %c0_i32_1 = arith.constant 0 : i32
    return %c0_i32, %c0_i32_0 : i32, i32
  }
  func.func @transform_2(%arg0: i32) -> (i32, i32) {
    %c0_i32 = arith.constant 0 : i32
    %c0_i32_0 = arith.constant 0 : i32
    %c0_i32_1 = arith.constant 0 : i32
    return %c0_i32, %c0_i32_0 : i32, i32
  }
  func.func @transform_3(%arg0: i32) -> (i32, i32) {
    %c0_i32 = arith.constant 0 : i32
    %c0_i32_0 = arith.constant 0 : i32
    %c0_i32_1 = arith.constant 0 : i32
    return %c0_i32, %c0_i32_0 : i32, i32
  }
  func.func @transform_4(%arg0: i32) -> (i32, i32) {
    %c0_i32 = arith.constant 0 : i32
    %c0_i32_0 = arith.constant 0 : i32
    %c0_i32_1 = arith.constant 0 : i32
    return %c0_i32, %c0_i32_0 : i32, i32
  }
  func.func @transform_5(%arg0: i32) -> (i32, i32) {
    %c0_i32 = arith.constant 0 : i32
    %c0_i32_0 = arith.constant 0 : i32
    %c0_i32_1 = arith.constant 0 : i32
    return %c0_i32, %c0_i32_0 : i32, i32
  }
  func.func @transform_6(%arg0: i32) -> (i32, i32) {
    %c0_i32 = arith.constant 0 : i32
    %c0_i32_0 = arith.constant 0 : i32
    %c0_i32_1 = arith.constant 0 : i32
    return %c0_i32, %c0_i32_0 : i32, i32
  }
  func.func @transform_7(%arg0: i32) -> (i32, i32) {
    %c0_i32 = arith.constant 0 : i32
    %c0_i32_0 = arith.constant 0 : i32
    %c0_i32_1 = arith.constant 0 : i32
    return %c0_i32, %c0_i32_0 : i32, i32
  }
  func.func @transform_8(%arg0: i32) -> (i32, i32, i32) {
    %c0_i32 = arith.constant 0 : i32
    %c0_i32_0 = arith.constant 0 : i32
    %c0_i32_1 = arith.constant 0 : i32
    return %arg0, %c0_i32, %c0_i32_0 : i32, i32, i32
  }
}

</mosaic_0001>

<llo_original>
// kernel: tpu_custom_call.1
$region0: #{tpu_custom_call.1}
  #allocation0 [shape = 'u32[]', space=smem, size = 0x4, offset = 0x4, fixed_abs, tag = 'smem constant byte address 0x4 - core index']
  #allocation1 [shape = 'u32[144,128]{1,0:T(1,128)}', space=vmem, size = 0x12000, scoped, tag = 'internal scratch']
  %s0 = inlined_call_operand.hbm [shape: bf16[2,16,640], index: 0, kind: input, shape index: {}]
  %s1 = inlined_call_operand.vmem [shape: bf16[16,144], index: 1, kind: input, shape index: {}]
  %s2 = inlined_call_operand.vmem [shape: bf16[8,144], index: 2, kind: input, shape index: {}]
  %s3 = inlined_call_operand.vmem [shape: f32[16,1], index: 3, kind: input, shape index: {}]
  %s4 = inlined_call_operand.vmem [shape: f32[16,1], index: 4, kind: input, shape index: {}]
  %s5 = inlined_call_operand.vmem [shape: f32[8,1], index: 5, kind: input, shape index: {}]
  %s6 = inlined_call_operand.vmem [shape: f32[8,1], index: 6, kind: input, shape index: {}]
  %s7 = inlined_call_operand.vmem [shape: f32[1,640], index: 7, kind: input, shape index: {}]
  %s8 = inlined_call_operand.hbm [shape: f32[2,8,384], index: 8, kind: output, shape index: {}]
  %s9 = sld [smem:[#allocation0]]
  $region69: #{tpu_custom_call.1} parent=0
    _
  %s11 = ssub.s32 1, %s9
  %s12 = scalar_select 0, %s11, %s9
  $region1: #{tpu_custom_call.1} parent=0
    #allocation2 [shape = 'u8[40960]{0}', space=vmem, size = 0xa000, scoped, tag = 'input window, operand 0']
    #allocation3 [shape = 's32[2]{0}', space=sflag, size = 0x8, scoped, tag = 'scoped memory for tpu_custom_call.1']
    #allocation4 [shape = 's32[2]{0}', space=sflag, size = 0x8, scoped, tag = 'scoped memory for tpu_custom_call.1']
    #allocation5 [shape = 'u8[24576]{0}', space=vmem, size = 0x6000, scoped, tag = 'output window, operand 0']
    %13 = vsyncpa [#allocation3], 0
    %s14 = scalar_lea.sflag [#allocation3], 1
    %15 = vsyncpa %s14, 0
    %16 = vsyncpa [#allocation4], 0
    %s17 = scalar_lea.sflag [#allocation4], 1
    %18 = vsyncpa %s17, 0
    loop: start=0, step=1, limit=4
    $region2: #{tpu_custom_call.1} parent=1 // loop_pre_header
      _
    $region3: #{tpu_custom_call.1} parent=1 // loop_header
      %s20 = sphi 0, %s24
      %p21 = scmp.ge.s32.totalorder %s20, 4
      %s30 = sphi 0, %s32
      %s33 = sphi 0, %s30
      %s34 = sphi 0, %s33
      %s50 = sphi 0, %s34
      %s54 = sphi 0, %s54
      %s56 = sphi 0, %s54
      %s57 = sphi 0, %s56
      %s71 = sphi 0, %s57
      %s75 = sphi 0, %s75
      %s77 = sphi 0, %s75
      %s78 = sphi 0, %s77
      %s92 = sphi 0, %s78
      %s96 = sphi 0, %s96
      %s98 = sphi 0, %s96
      %s99 = sphi 0, %s98
      %s113 = sphi 0, %s99
      %s117 = sphi 0, %s117
      %s119 = sphi 0, %s117
      %s120 = sphi 0, %s119
      %s134 = sphi 0, %s120
      %s138 = sphi 0, %s138
      %s140 = sphi 0, %s138
      %s141 = sphi 0, %s140
      %s155 = sphi 0, %s141
      %s159 = sphi 0, %s159
      %s161 = sphi 0, %s159
      %s162 = sphi 0, %s161
      %s176 = sphi 0, %s162
      %s180 = sphi 0, %s180
      %s182 = sphi 0, %s180
      %s183 = sphi 0, %s182
      %s197 = sphi 0, %s183
      %s203 = sphi 0, %s205
      %s206 = sphi 0, %s203
      %s207 = sphi 0, %s206
      %s223 = sphi 0, %s207
    $region4: #{tpu_custom_call.1} parent=1 // loop_header_branch
      %23 = sbr.rel (%p21) target = $region8
    $region5: #{tpu_custom_call.1} parent=1 // loop_body
      %s25 = ssub.s32 %s20, 1
      %s26 = ssub.s32 %s20, 2
      %s27 = sadd.s32 %s20, 1
      %s28 = ssub.s32 %s20, %s27
      %p29 = scmp.eq.s32.totalorder %s28, 0
      %s31 = sadd.s32 %s30, 1
      %s32 = scalar_select %p29, %s30, %s31
      %p35 = pneg %p29
      %p36 = scmp.eq.s32.totalorder %s20, 1
      %p37 = por %p35, %p36
      %p38 = scmp.ne.s32.totalorder %s30, %s33
      %p39 = scmp.eq.s32.totalorder %s20, 0
      %p40 = por %p38, %p39
      %p41 = scmp.ne.s32.totalorder %s30, %s33
      %p42 = scmp.eq.s32.totalorder %s25, 1
      %p43 = por %p41, %p42
      %p44 = scmp.ne.s32.totalorder %s33, %s34
      %p45 = scmp.eq.s32.totalorder %s25, 0
      %p46 = por %p44, %p45
      %p47 = scmp.ne.s32.totalorder %s33, %s34
      %p48 = scmp.eq.s32.totalorder %s26, 1
      %p49 = por %p47, %p48
      %p51 = scmp.ne.s32.totalorder %s34, %s50
      %p52 = scmp.eq.s32.totalorder %s26, 0
      %p53 = por %p51, %p52
      %s55 = sadd.s32 %s54, 1
      %p58 = scmp.eq.s32.totalorder %s20, 1
      %p59 = scmp.ne.s32.totalorder %s54, %s56
      %p60 = scmp.eq.s32.totalorder %s20, 0
      %p61 = por %p59, %p60
      %p62 = scmp.ne.s32.totalorder %s54, %s56
      %p63 = scmp.eq.s32.totalorder %s25, 1
      %p64 = por %p62, %p63
      %p65 = scmp.ne.s32.totalorder %s56, %s57
      %p66 = scmp.eq.s32.totalorder %s25, 0
      %p67 = por %p65, %p66
      %p68 = scmp.ne.s32.totalorder %s56, %s57
      %p69 = scmp.eq.s32.totalorder %s26, 1
      %p70 = por %p68, %p69
      %p72 = scmp.ne.s32.totalorder %s57, %s71
      %p73 = scmp.eq.s32.totalorder %s26, 0
      %p74 = por %p72, %p73
      %s76 = sadd.s32 %s75, 1
      %p79 = scmp.eq.s32.totalorder %s20, 1
      %p80 = scmp.ne.s32.totalorder %s75, %s77
      %p81 = scmp.eq.s32.totalorder %s20, 0
      %p82 = por %p80, %p81
      %p83 = scmp.ne.s32.totalorder %s75, %s77
      %p84 = scmp.eq.s32.totalorder %s25, 1
      %p85 = por %p83, %p84
      %p86 = scmp.ne.s32.totalorder %s77, %s78
      %p87 = scmp.eq.s32.totalorder %s25, 0
      %p88 = por %p86, %p87
      %p89 = scmp.ne.s32.totalorder %s77, %s78
      %p90 = scmp.eq.s32.totalorder %s26, 1
      %p91 = por %p89, %p90
      %p93 = scmp.ne.s32.totalorder %s78, %s92
      %p94 = scmp.eq.s32.totalorder %s26, 0
      %p95 = por %p93, %p94
      %s97 = sadd.s32 %s96, 1
      %p100 = scmp.eq.s32.totalorder %s20, 1
      %p101 = scmp.ne.s32.totalorder %s96, %s98
      %p102 = scmp.eq.s32.totalorder %s20, 0
      %p103 = por %p101, %p102
      %p104 = scmp.ne.s32.totalorder %s96, %s98
      %p105 = scmp.eq.s32.totalorder %s25, 1
      %p106 = por %p104, %p105
      %p107 = scmp.ne.s32.totalorder %s98, %s99
      %p108 = scmp.eq.s32.totalorder %s25, 0
      %p109 = por %p107, %p108
      %p110 = scmp.ne.s32.totalorder %s98, %s99
      %p111 = scmp.eq.s32.totalorder %s26, 1
      %p112 = por %p110, %p111
      %p114 = scmp.ne.s32.totalorder %s99, %s113
      %p115 = scmp.eq.s32.totalorder %s26, 0
      %p116 = por %p114, %p115
      %s118 = sadd.s32 %s117, 1
      %p121 = scmp.eq.s32.totalorder %s20, 1
      %p122 = scmp.ne.s32.totalorder %s117, %s119
      %p123 = scmp.eq.s32.totalorder %s20, 0
      %p124 = por %p122, %p123
      %p125 = scmp.ne.s32.totalorder %s117, %s119
      %p126 = scmp.eq.s32.totalorder %s25, 1
      %p127 = por %p125, %p126
      %p128 = scmp.ne.s32.totalorder %s119, %s120
      %p129 = scmp.eq.s32.totalorder %s25, 0
      %p130 = por %p128, %p129
      %p131 = scmp.ne.s32.totalorder %s119, %s120
      %p132 = scmp.eq.s32.totalorder %s26, 1
      %p133 = por %p131, %p132
      %p135 = scmp.ne.s32.totalorder %s120, %s134
      %p136 = scmp.eq.s32.totalorder %s26, 0
      %p137 = por %p135, %p136
      %s139 = sadd.s32 %s138, 1
      %p142 = scmp.eq.s32.totalorder %s20, 1
      %p143 = scmp.ne.s32.totalorder %s138, %s140
      %p144 = scmp.eq.s32.totalorder %s20, 0
      %p145 = por %p143, %p144
      %p146 = scmp.ne.s32.totalorder %s138, %s140
      %p147 = scmp.eq.s32.totalorder %s25, 1
      %p148 = por %p146, %p147
      %p149 = scmp.ne.s32.totalorder %s140, %s141
      %p150 = scmp.eq.s32.totalorder %s25, 0
      %p151 = por %p149, %p150
      %p152 = scmp.ne.s32.totalorder %s140, %s141
      %p153 = scmp.eq.s32.totalorder %s26, 1
      %p154 = por %p152, %p153
      %p156 = scmp.ne.s32.totalorder %s141, %s155
      %p157 = scmp.eq.s32.totalorder %s26, 0
      %p158 = por %p156, %p157
      %s160 = sadd.s32 %s159, 1
      %p163 = scmp.eq.s32.totalorder %s20, 1
      %p164 = scmp.ne.s32.totalorder %s159, %s161
      %p165 = scmp.eq.s32.totalorder %s20, 0
      %p166 = por %p164, %p165
      %p167 = scmp.ne.s32.totalorder %s159, %s161
      %p168 = scmp.eq.s32.totalorder %s25, 1
      %p169 = por %p167, %p168
      %p170 = scmp.ne.s32.totalorder %s161, %s162
      %p171 = scmp.eq.s32.totalorder %s25, 0
      %p172 = por %p170, %p171
      %p173 = scmp.ne.s32.totalorder %s161, %s162
      %p174 = scmp.eq.s32.totalorder %s26, 1
      %p175 = por %p173, %p174
      %p177 = scmp.ne.s32.totalorder %s162, %s176
      %p178 = scmp.eq.s32.totalorder %s26, 0
      %p179 = por %p177, %p178
      %s181 = sadd.s32 %s180, 1
      %p184 = scmp.eq.s32.totalorder %s20, 1
      %p185 = scmp.ne.s32.totalorder %s180, %s182
      %p186 = scmp.eq.s32.totalorder %s20, 0
      %p187 = por %p185, %p186
      %p188 = scmp.ne.s32.totalorder %s180, %s182
      %p189 = scmp.eq.s32.totalorder %s25, 1
      %p190 = por %p188, %p189
      %p191 = scmp.ne.s32.totalorder %s182, %s183
      %p192 = scmp.eq.s32.totalorder %s25, 0
      %p193 = por %p191, %p192
      %p194 = scmp.ne.s32.totalorder %s182, %s183
      %p195 = scmp.eq.s32.totalorder %s26, 1
      %p196 = por %p194, %p195
      %p198 = scmp.ne.s32.totalorder %s183, %s197
      %p199 = scmp.eq.s32.totalorder %s26, 0
      %p200 = por %p198, %p199
      %s201 = ssub.s32 %s20, %s27
      %p202 = scmp.eq.s32.totalorder %s201, 0
      %s204 = sadd.s32 %s203, 1
      %s205 = scalar_select %p202, %s203, %s204
      %p208 = pneg %p202
      %p209 = scmp.eq.s32.totalorder %s20, 1
      %p210 = por %p208, %p209
      %p211 = scmp.ne.s32.totalorder %s203, %s206
      %p212 = scmp.eq.s32.totalorder %s20, 0
      %p213 = por %p211, %p212
      %p214 = scmp.ne.s32.totalorder %s203, %s206
      %p215 = scmp.eq.s32.totalorder %s25, 1
      %p216 = por %p214, %p215
      %p217 = scmp.ne.s32.totalorder %s206, %s207
      %p218 = scmp.eq.s32.totalorder %s25, 0
      %p219 = por %p217, %p218
      %p220 = scmp.ne.s32.totalorder %s206, %s207
      %p221 = scmp.eq.s32.totalorder %s26, 1
      %p222 = por %p220, %p221
      %p224 = scmp.ne.s32.totalorder %s207, %s223
      %p225 = scmp.eq.s32.totalorder %s26, 0
      %p226 = por %p224, %p225
      %p227 = scmp.le.s32.totalorder 1, %s20
      %p228 = scmp.lt.s32.totalorder %s20, 3
      %p229 = pnand %p227, %p228
      %p230 = pneg %p229
      // Predicated region
      $region9: #{tpu_custom_call.1} parent=5 // pred_check
        _
      $region10: #{tpu_custom_call.1} parent=5 // pred_check_branch
        %232 = sbr.rel (%p229) target = $region12
      $region11: #{tpu_custom_call.1} parent=5 // pred_region
        %s233 = ssub.s32 %s20, 1
        // Predicated region
        $region13: #{tpu_custom_call.1} parent=11 // pred_check
          %p234 = pneg %p67
        $region14: #{tpu_custom_call.1} parent=11 // pred_check_branch
          %236 = sbr.rel (%p234) target = $region16
        $region15: #{tpu_custom_call.1} parent=11 // pred_region
          _
        $region16: #{tpu_custom_call.1} parent=11 // pred_fallthru
          _
        // Predicated region
        $region17: #{tpu_custom_call.1} parent=11 // pred_check
          %p237 = pneg %p88
        $region18: #{tpu_custom_call.1} parent=11 // pred_check_branch
          %239 = sbr.rel (%p237) target = $region20
        $region19: #{tpu_custom_call.1} parent=11 // pred_region
          _
        $region20: #{tpu_custom_call.1} parent=11 // pred_fallthru
          _
        // Predicated region
        $region21: #{tpu_custom_call.1} parent=11 // pred_check
          %p240 = pneg %p109
        $region22: #{tpu_custom_call.1} parent=11 // pred_check_branch
          %242 = sbr.rel (%p240) target = $region24
        $region23: #{tpu_custom_call.1} parent=11 // pred_region
          _
        $region24: #{tpu_custom_call.1} parent=11 // pred_fallthru
          _
        // Predicated region
        $region25: #{tpu_custom_call.1} parent=11 // pred_check
          %p243 = pneg %p130
        $region26: #{tpu_custom_call.1} parent=11 // pred_check_branch
          %245 = sbr.rel (%p243) target = $region28
        $region27: #{tpu_custom_call.1} parent=11 // pred_region
          _
        $region28: #{tpu_custom_call.1} parent=11 // pred_fallthru
          _
        // Predicated region
        $region29: #{tpu_custom_call.1} parent=11 // pred_check
          %p246 = pneg %p151
        $region30: #{tpu_custom_call.1} parent=11 // pred_check_branch
          %248 = sbr.rel (%p246) target = $region32
        $region31: #{tpu_custom_call.1} parent=11 // pred_region
          _
        $region32: #{tpu_custom_call.1} parent=11 // pred_fallthru
          _
        // Predicated region
        $region33: #{tpu_custom_call.1} parent=11 // pred_check
          %p249 = pneg %p172
        $region34: #{tpu_custom_call.1} parent=11 // pred_check_branch
          %251 = sbr.rel (%p249) target = $region36
        $region35: #{tpu_custom_call.1} parent=11 // pred_region
          _
        $region36: #{tpu_custom_call.1} parent=11 // pred_fallthru
          _
        // Predicated region
        $region37: #{tpu_custom_call.1} parent=11 // pred_check
          %p252 = pneg %p193
        $region38: #{tpu_custom_call.1} parent=11 // pred_check_branch
          %254 = sbr.rel (%p252) target = $region40
        $region39: #{tpu_custom_call.1} parent=11 // pred_region
          _
        $region40: #{tpu_custom_call.1} parent=11 // pred_fallthru
          _
      $region12: #{tpu_custom_call.1} parent=5 // pred_fallthru
        _
      %p255 = scmp.lt.s32.totalorder %s20, 2
      // Predicated region
      $region41: #{tpu_custom_call.1} parent=5 // pred_check
        %p256 = pneg %p255
      $region42: #{tpu_custom_call.1} parent=5 // pred_check_branch
        %258 = sbr.rel (%p256) target = $region44
      $region43: #{tpu_custom_call.1} parent=5 // pred_region
        // Predicated region
        $region45: #{tpu_custom_call.1} parent=43 // pred_check
          %p259 = pneg %p40
        $region46: #{tpu_custom_call.1} parent=43 // pred_check_branch
          %261 = sbr.rel (%p259) target = $region48
        $region47: #{tpu_custom_call.1} parent=43 // pred_region
          %s262 = sand.u32 %s30, 1
          %s263 = scalar_lea.sflag [#allocation3], %s262
          %s264 = sand.u32 %s30, 1
          %s265 = smul.addr %s264, 40
          %s266 = scalar_lea.vmem [#allocation2], %s265
          %s268 = ssub.s32 640, 640
          %269 = vsyncadd %s263, %s268
          %s270 = smul.addr %s20, 10
          %s271 = smul.addr %s270, 64
          %s272 = scalar_lea.hbm %s0, %s271
          %s273 = sshll.u32 %s266, 4
          %s274 = int_to_ptr.vmem [resolvable:$true] %s273
          %279 = dma.hbm_to_vmem [thread:$0]  %s272, 640, %s274, %s263, 320, 320, 20
        $region48: #{tpu_custom_call.1} parent=43 // pred_fallthru
          _
      $region44: #{tpu_custom_call.1} parent=5 // pred_fallthru
        _
      %p280 = scmp.le.s32.totalorder 1, %s20
      %p281 = scmp.lt.s32.totalorder %s20, 3
      %p282 = pnand %p280, %p281
      %p283 = pneg %p282
      // Predicated region
      $region49: #{tpu_custom_call.1} parent=5 // pred_check
        _
      $region50: #{tpu_custom_call.1} parent=5 // pred_check_branch
        %285 = sbr.rel (%p282) target = $region52
      $region51: #{tpu_custom_call.1} parent=5 // pred_region
        %s286 = ssub.s32 %s20, 1
        %s287 = sand.u32 %s33, 1
        %s288 = scalar_lea.sflag [#allocation3], %s287
        %s289 = sand.u32 %s33, 1
        %s290 = smul.addr %s289, 40
        %s291 = scalar_lea.vmem [#allocation2], %s290
        // Predicated region
        $region53: #{tpu_custom_call.1} parent=51 // pred_check
          %p292 = pneg %p46
        $region54: #{tpu_custom_call.1} parent=51 // pred_check_branch
          %294 = sbr.rel (%p292) target = $region56
        $region55: #{tpu_custom_call.1} parent=51 // pred_region
          %295 = dma.done %s288, 640
        $region56: #{tpu_custom_call.1} parent=51 // pred_fallthru
          _
        %s296 = sand.u32 %s33, 1
        %s297 = scalar_lea.sflag [#allocation3], %s296
        %s298 = sand.u32 %s33, 1
        %s299 = smul.addr %s298, 40
        %s300 = scalar_lea.vmem [#allocation2], %s299
        %p301 = pneg %p46
        %p302 = pneg %p43
        %p303 = pneg %p67
        %p304 = pneg %p64
        %p305 = pneg %p88
        %p306 = pneg %p85
        %p307 = pneg %p109
        %p308 = pneg %p106
        %p309 = pneg %p130
        %p310 = pneg %p127
        %p311 = pneg %p151
        %p312 = pneg %p148
        %p313 = pneg %p172
        %p314 = pneg %p169
        %p315 = pneg %p193
        %p316 = pneg %p190
        %p317 = pneg %p219
        %p318 = pneg %p216
        %s319 = sand.u32 %s206, 1
        %s320 = scalar_lea.sflag [#allocation4], %s319
        %s321 = sand.u32 %s206, 1
        %s322 = smul.addr %s321, 24
        %s323 = scalar_lea.vmem [#allocation5], %s322
        %v325 = vld [vmem:[%s291] sm:$0xff]
        %v326 = vld [vmem:[%s291 + $0x8] sm:$0xff]
        %v327 = vld [vmem:[%s291 + $0x10] sm:$0xf]
        %v328 = vld [vmem:[%s291 + $0x14] sm:$0xff]
        %v329 = vld [vmem:[%s291 + $0x1c] sm:$0xff]
        %v330 = vld [vmem:[%s291 + $0x24] sm:$0xf]
        %v331 = vld [vmem:[%s7] sm:$0x1f]
        %v336 = vunpack.c.l.b16 %v325
        %v337 = vunpack.c.h.b16 %v325
        %v338 = vunpack.c.l.b16 %v326
        %v339 = vunpack.c.h.b16 %v326
        %v340 = vunpack.c.l.b16 %v328
        %v341 = vunpack.c.h.b16 %v328
        %v342 = vunpack.c.l.b16 %v329
        %v343 = vunpack.c.h.b16 %v329
        %v344 = vpack.c.b16 %v340, %v336
        %v345 = vpack.c.b16 %v341, %v337
        %v346 = vpack.c.b16 %v342, %v338
        %v347 = vpack.c.b16 %v343, %v339
        %v354 = vunpack.c.l.b16 %v327
        %v355 = vunpack.c.l.b16 %v330
        %v356 = vpack.c.b16 %v355, %v354
        %357 = vrot.lane.b32.xlu0 %v344, 127
        %v358 = vpop.permute.xlu0 %357
        %359 = vrot.lane.b32.xlu0 %v345, 127
        %v360 = vpop.permute.xlu0 %359
        %361 = vrot.lane.b32.xlu0 %v346, 127
        %v362 = vpop.permute.xlu0 %361
        %363 = vrot.lane.b32.xlu0 %v347, 127
        %v364 = vpop.permute.xlu0 %363
        %365 = vrot.lane.b32.xlu0 %v356, 127
        %v366 = vpop.permute.xlu0 %365
        %vm367 = vcmask 1039360
        %v368 = vsel %vm367, %v358, %v360
        %v369 = vsel %vm367, %v360, %v362
        %v370 = vsel %vm367, %v362, %v364
        %v371 = vsel %vm367, %v364, %v366
        %376 = vrot.lane.b32.xlu0 %v344, 126
        %v377 = vpop.permute.xlu0 %376
        %378 = vrot.lane.b32.xlu0 %v345, 126
        %v379 = vpop.permute.xlu0 %378
        %380 = vrot.lane.b32.xlu0 %v346, 126
        %v381 = vpop.permute.xlu0 %380
        %382 = vrot.lane.b32.xlu0 %v347, 126
        %v383 = vpop.permute.xlu0 %382
        %384 = vrot.lane.b32.xlu0 %v356, 126
        %v385 = vpop.permute.xlu0 %384
        %vm386 = vcmask 1031168
        %v387 = vsel %vm386, %v377, %v379
        %v388 = vsel %vm386, %v379, %v381
        %v389 = vsel %vm386, %v381, %v383
        %v390 = vsel %vm386, %v383, %v385
        %395 = vrot.lane.b32.xlu0 %v344, 108
        %v396 = vpop.permute.xlu0 %395
        %397 = vrot.lane.b32.xlu0 %v345, 108
        %v398 = vpop.permute.xlu0 %397
        %399 = vrot.lane.b32.xlu0 %v346, 108
        %v400 = vpop.permute.xlu0 %399
        %401 = vrot.lane.b32.xlu0 %v347, 108
        %v402 = vpop.permute.xlu0 %401
        %403 = vrot.lane.b32.xlu0 %v356, 108
        %v404 = vpop.permute.xlu0 %403
        %vm405 = vcmask 883712
        %v406 = vsel %vm405, %v396, %v398
        %v407 = vsel %vm405, %v398, %v400
        %v408 = vsel %vm405, %v400, %v402
        %v409 = vsel %vm405, %v402, %v404
        %414 = vrot.lane.b32.xlu0 %v344, 107
        %v415 = vpop.permute.xlu0 %414
        %416 = vrot.lane.b32.xlu0 %v345, 107
        %v417 = vpop.permute.xlu0 %416
        %418 = vrot.lane.b32.xlu0 %v346, 107
        %v419 = vpop.permute.xlu0 %418
        %420 = vrot.lane.b32.xlu0 %v347, 107
        %v421 = vpop.permute.xlu0 %420
        %422 = vrot.lane.b32.xlu0 %v356, 107
        %v423 = vpop.permute.xlu0 %422
        %vm424 = vcmask 875520
        %v425 = vsel %vm424, %v415, %v417
        %v426 = vsel %vm424, %v417, %v419
        %v427 = vsel %vm424, %v419, %v421
        %v428 = vsel %vm424, %v421, %v423
        %433 = vrot.lane.b32.xlu0 %v344, 106
        %v434 = vpop.permute.xlu0 %433
        %435 = vrot.lane.b32.xlu0 %v345, 106
        %v436 = vpop.permute.xlu0 %435
        %437 = vrot.lane.b32.xlu0 %v346, 106
        %v438 = vpop.permute.xlu0 %437
        %439 = vrot.lane.b32.xlu0 %v347, 106
        %v440 = vpop.permute.xlu0 %439
        %441 = vrot.lane.b32.xlu0 %v356, 106
        %v442 = vpop.permute.xlu0 %441
        %vm443 = vcmask 867328
        %v444 = vsel %vm443, %v434, %v436
        %v445 = vsel %vm443, %v436, %v438
        %v446 = vsel %vm443, %v438, %v440
        %v447 = vsel %vm443, %v440, %v442
        %452 = vrot.lane.b32.xlu0 %v344, 88
        %v453 = vpop.permute.xlu0 %452
        %454 = vrot.lane.b32.xlu0 %v345, 88
        %v455 = vpop.permute.xlu0 %454
        %456 = vrot.lane.b32.xlu0 %v346, 88
        %v457 = vpop.permute.xlu0 %456
        %458 = vrot.lane.b32.xlu0 %v347, 88
        %v459 = vpop.permute.xlu0 %458
        %460 = vrot.lane.b32.xlu0 %v356, 88
        %v461 = vpop.permute.xlu0 %460
        %vm462 = vcmask 719872
        %v463 = vsel %vm462, %v453, %v455
        %v464 = vsel %vm462, %v455, %v457
        %v465 = vsel %vm462, %v457, %v459
        %v466 = vsel %vm462, %v459, %v461
        %471 = vrot.lane.b32.xlu0 %v344, 87
        %v472 = vpop.permute.xlu0 %471
        %473 = vrot.lane.b32.xlu0 %v345, 87
        %v474 = vpop.permute.xlu0 %473
        %475 = vrot.lane.b32.xlu0 %v346, 87
        %v476 = vpop.permute.xlu0 %475
        %477 = vrot.lane.b32.xlu0 %v347, 87
        %v478 = vpop.permute.xlu0 %477
        %479 = vrot.lane.b32.xlu0 %v356, 87
        %v480 = vpop.permute.xlu0 %479
        %vm481 = vcmask 711680
        %v482 = vsel %vm481, %v472, %v474
        %v483 = vsel %vm481, %v474, %v476
        %v484 = vsel %vm481, %v476, %v478
        %v485 = vsel %vm481, %v478, %v480
        %490 = vrot.lane.b32.xlu0 %v344, 86
        %v491 = vpop.permute.xlu0 %490
        %492 = vrot.lane.b32.xlu0 %v345, 86
        %v493 = vpop.permute.xlu0 %492
        %494 = vrot.lane.b32.xlu0 %v346, 86
        %v495 = vpop.permute.xlu0 %494
        %496 = vrot.lane.b32.xlu0 %v347, 86
        %v497 = vpop.permute.xlu0 %496
        %498 = vrot.lane.b32.xlu0 %v356, 86
        %v499 = vpop.permute.xlu0 %498
        %vm500 = vcmask 703488
        %v501 = vsel %vm500, %v491, %v493
        %v502 = vsel %vm500, %v493, %v495
        %v503 = vsel %vm500, %v495, %v497
        %v504 = vsel %vm500, %v497, %v499
        %v509 = vld [vmem:[%s1] sm:$0xff]
        %v510 = vld [vmem:[%s1 + $0x8] sm:$0xff]
        %v513 = vunpack.c.l.b16 %v509
        %v514 = vunpack.c.h.b16 %v509
        %v515 = vunpack.c.l.b16 %v510
        %v516 = vunpack.c.h.b16 %v510
        %v517 = vpack.c.b16 %v515, %v513
        %v518 = vpack.c.b16 %v516, %v514
        %vm520 = vcmask 130048
        %v522 = vsel %vm520, %v518, 0
        %524 = vmatprep.subr.bf16.mxu0 %v345
        %525 = vmatpush1.bf16.msra.mxu0 %v344
        %526 = vmatprep.subr.bf16.mxu0 %v369
        %527 = vmatpush1.bf16.msra.mxu0 %v368
        %528 = vmatprep.subr.bf16.mxu0 %v388
        %529 = vmatpush1.bf16.msra.mxu0 %v387
        %530 = vmatprep.subr.bf16.mxu0 %v407
        %531 = vmatpush1.bf16.msra.mxu0 %v406
        %532 = vmatprep.subr.bf16.mxu0 %v426
        %533 = vmatpush1.bf16.msra.mxu0 %v425
        %534 = vmatprep.subr.bf16.mxu0 %v445
        %535 = vmatpush1.bf16.msra.mxu0 %v444
        %536 = vmatprep.subr.bf16.mxu0 %v464
        %537 = vmatpush1.bf16.msra.mxu0 %v463
        %538 = vmatprep.subr.bf16.mxu0 %v483
        %539 = vmatpush1.bf16.msra.mxu0 %v482
        %540 = vmatprep.subr.bf16.mxu0 %v502
        %541 = vmatpush1.bf16.msra.mxu0 %v501
        %542 = vmatprep.subr.bf16.mxu0 0
        %543 = vmatpush1.bf16.msra.mxu0 0
        %544 = vmatprep.subr.bf16.mxu0 0
        %545 = vmatpush1.bf16.msra.mxu0 0
        %546 = vmatprep.subr.bf16.mxu0 0
        %547 = vmatpush1.bf16.msra.mxu0 0
        %548 = vmatprep.subr.bf16.mxu0 0
        %549 = vmatpush1.bf16.msra.mxu0 0
        %550 = vmatprep.subr.bf16.mxu0 0
        %551 = vmatpush1.bf16.msra.mxu0 0
        %552 = vmatprep.subr.bf16.mxu0 0
        %553 = vmatpush1.bf16.msra.mxu0 0
        %554 = vmatprep.subr.bf16.mxu0 0
        %555 = vmatpush1.bf16.msra.mxu0 0
        %556 = vmatprep.mubr.bf16.mxu0 %v522
        %557 = vmatmul.mubr.bf16.gmra.mrb[0].mxu0 %v517
        %v558 = vpop.f32.mrb[0].mxu0
        %v559 = vadd.f32 0.0, %v558
        %v560 = vpop.f32.mrb[0].mxu0
        %v561 = vadd.f32 0.0, %v560
        %v562 = vpop.f32.mrb[0].mxu0
        %v563 = vadd.f32 0.0, %v562
        %v564 = vpop.f32.mrb[0].mxu0
        %v565 = vadd.f32 0.0, %v564
        %566 = vdwg.mxu0
        %567 = vmatprep.subr.bf16.mxu0 %v347
        %568 = vmatpush1.bf16.msra.mxu0 %v346
        %569 = vmatprep.subr.bf16.mxu0 %v371
        %570 = vmatpush1.bf16.msra.mxu0 %v370
        %571 = vmatprep.subr.bf16.mxu0 %v390
        %572 = vmatpush1.bf16.msra.mxu0 %v389
        %573 = vmatprep.subr.bf16.mxu0 %v409
        %574 = vmatpush1.bf16.msra.mxu0 %v408
        %575 = vmatprep.subr.bf16.mxu0 %v428
        %576 = vmatpush1.bf16.msra.mxu0 %v427
        %577 = vmatprep.subr.bf16.mxu0 %v447
        %578 = vmatpush1.bf16.msra.mxu0 %v446
        %579 = vmatprep.subr.bf16.mxu0 %v466
        %580 = vmatpush1.bf16.msra.mxu0 %v465
        %581 = vmatprep.subr.bf16.mxu0 %v485
        %582 = vmatpush1.bf16.msra.mxu0 %v484
        %583 = vmatprep.subr.bf16.mxu0 %v504
        %584 = vmatpush1.bf16.msra.mxu0 %v503
        %585 = vmatprep.subr.bf16.mxu0 0
        %586 = vmatpush1.bf16.msra.mxu0 0
        %587 = vmatprep.subr.bf16.mxu0 0
        %588 = vmatpush1.bf16.msra.mxu0 0
        %589 = vmatprep.subr.bf16.mxu0 0
        %590 = vmatpush1.bf16.msra.mxu0 0
        %591 = vmatprep.subr.bf16.mxu0 0
        %592 = vmatpush1.bf16.msra.mxu0 0
        %593 = vmatprep.subr.bf16.mxu0 0
        %594 = vmatpush1.bf16.msra.mxu0 0
        %595 = vmatprep.subr.bf16.mxu0 0
        %596 = vmatpush1.bf16.msra.mxu0 0
        %597 = vmatprep.subr.bf16.mxu0 0
        %598 = vmatpush1.bf16.msra.mxu0 0
        %599 = vmatprep.mubr.bf16.mxu0 %v522
        %600 = vmatmul.mubr.bf16.gmra.mrb[0].mxu0 %v517
        %v601 = vpop.f32.mrb[0].mxu0
        %v602 = vadd.f32 0.0, %v601
        %v603 = vpop.f32.mrb[0].mxu0
        %v604 = vadd.f32 0.0, %v603
        %v605 = vpop.f32.mrb[0].mxu0
        %v606 = vadd.f32 0.0, %v605
        %v607 = vpop.f32.mrb[0].mxu0
        %v608 = vadd.f32 0.0, %v607
        %609 = vdwg.mxu0
        %v610 = vld [vmem:[%s3] sm:$0xff]
        %v611 = vld [vmem:[%s3 + $0x8] sm:$0xff]
        %v612 = vld [vmem:[%s4] sm:$0xff]
        %v613 = vld [vmem:[%s4 + $0x8] sm:$0xff]
        %v615 = vlaneseq
        %v616 = vshrl.u32 %v615, 7
        %v617 = vsub.s32 0, %v616
        %v618 = vrot.slane %v331, %v617
        %v619 = vlaneseq
        %v620 = vshrl.u32 %v619, 7
        %v621 = vsub.s32 1, %v620
        %v622 = vrot.slane %v331, %v621
        %v623 = vlaneseq
        %v624 = vshrl.u32 %v623, 7
        %v625 = vsub.s32 2, %v624
        %v626 = vrot.slane %v331, %v625
        %v627 = vlaneseq
        %v628 = vshrl.u32 %v627, 7
        %v629 = vsub.s32 3, %v628
        %v630 = vrot.slane %v331, %v629
        %v631 = vlaneseq
        %v632 = vshrl.u32 %v631, 7
        %v633 = vsub.s32 4, %v632
        %v634 = vrot.slane %v331, %v633
        %635 = vrot.lane.b32.xlu0 %v618, 107
        %v636 = vpop.permute.xlu0 %635
        %637 = vrot.lane.b32.xlu0 %v622, 107
        %v638 = vpop.permute.xlu0 %637
        %639 = vrot.lane.b32.xlu0 %v626, 107
        %v640 = vpop.permute.xlu0 %639
        %641 = vrot.lane.b32.xlu0 %v630, 107
        %v642 = vpop.permute.xlu0 %641
        %643 = vrot.lane.b32.xlu0 %v634, 107
        %v644 = vpop.permute.xlu0 %643
        %vm645 = vcmask 875520
        %v646 = vsel %vm645, %v636, %v638
        %v647 = vsel %vm645, %v638, %v640
        %v648 = vsel %vm645, %v640, %v642
        %v649 = vsel %vm645, %v642, %v644
        %v654 = vmul.f32 %v559, %v646
        %v655 = vmul.f32 %v561, %v647
        %v656 = vmul.f32 %v602, %v648
        %v657 = vmul.f32 %v604, %v649
        %v658 = vmul.f32 %v563, %v646
        %v659 = vmul.f32 %v565, %v647
        %v660 = vmul.f32 %v606, %v648
        %v661 = vmul.f32 %v608, %v649
        %v662 = vadd.f32 %v654, %v655
        %v663 = vadd.f32 %v662, %v656
        %v664 = vadd.f32 %v663, %v657
        %665 = vadd.xlane.f32.xlu0 %v664
        %v666 = vpop.xlane.xlu0 %665
        %v667 = vadd.f32 %v658, %v659
        %v668 = vadd.f32 %v667, %v660
        %v669 = vadd.f32 %v668, %v661
        %670 = vadd.xlane.f32.xlu0 %v669
        %v671 = vpop.xlane.xlu0 %670
        %vm672 = vcmask 7168
        %v673 = vsel %vm672, %v666, 0.0
        %v674 = vsel %vm672, %v671, 0.0
        %v675 = vadd.f32 %v673, %v674
        %676 = vadd.xlane.f32.xlu0 %v675
        %v677 = vpop.xlane.xlu0 %676
        %v678 = vrot.slane %v677, 4
        %v679 = vadd.f32 %v677, %v678
        %v680 = vrot.slane %v679, 2
        %v681 = vadd.f32 %v679, %v680
        %v682 = vrot.slane %v681, 1
        %v683 = vadd.f32 %v681, %v682
        %s684 = vtos %v683
        %v685 = vrcp.pop 2048.0
        %s686 = vtos %v685
        %s687 = smul.f32 %s684, %s686
        %v688 = vstv %s687
        %v689 = vsub.f32 %v559, %v688
        %v690 = vsub.f32 %v561, %v688
        %v691 = vsub.f32 %v602, %v688
        %v692 = vsub.f32 %v604, %v688
        %v693 = vsub.f32 %v563, %v688
        %v694 = vsub.f32 %v565, %v688
        %v695 = vsub.f32 %v606, %v688
        %v696 = vsub.f32 %v608, %v688
        %v697 = vmul.f32 %v689, %v646
        %v698 = vmul.f32 %v690, %v647
        %v699 = vmul.f32 %v691, %v648
        %v700 = vmul.f32 %v692, %v649
        %v701 = vmul.f32 %v693, %v646
        %v702 = vmul.f32 %v694, %v647
        %v703 = vmul.f32 %v695, %v648
        %v704 = vmul.f32 %v696, %v649
        %v705 = vmul.f32 %v697, %v697
        %v706 = vmul.f32 %v698, %v698
        %v707 = vmul.f32 %v699, %v699
        %v708 = vmul.f32 %v700, %v700
        %v709 = vmul.f32 %v701, %v701
        %v710 = vmul.f32 %v702, %v702
        %v711 = vmul.f32 %v703, %v703
        %v712 = vmul.f32 %v704, %v704
        %v713 = vadd.f32 %v705, %v706
        %v714 = vadd.f32 %v713, %v707
        %v715 = vadd.f32 %v714, %v708
        %716 = vadd.xlane.f32.xlu0 %v715
        %v717 = vpop.xlane.xlu0 %716
        %v718 = vadd.f32 %v709, %v710
        %v719 = vadd.f32 %v718, %v711
        %v720 = vadd.f32 %v719, %v712
        %721 = vadd.xlane.f32.xlu0 %v720
        %v722 = vpop.xlane.xlu0 %721
        %v723 = vsel %vm672, %v717, 0.0
        %v724 = vsel %vm672, %v722, 0.0
        %v725 = vadd.f32 %v723, %v724
        %726 = vadd.xlane.f32.xlu0 %v725
        %v727 = vpop.xlane.xlu0 %726
        %v728 = vrot.slane %v727, 4
        %v729 = vadd.f32 %v727, %v728
        %v730 = vrot.slane %v729, 2
        %v731 = vadd.f32 %v729, %v730
        %v732 = vrot.slane %v731, 1
        %v733 = vadd.f32 %v731, %v732
        %s734 = vtos %v733
        %v735 = vrcp.pop 2048.0
        %s736 = vtos %v735
        %s737 = smul.f32 %s734, %s736
        %s738 = smul.f32 %s687, %s687
        %s739 = ssub.f32 %s737, %s738
        %s740 = smax.f32 %s739, 0.0
        %s741 = sadd.f32 %s740, 1e-05
        %v742 = vstv %s741
        %v743 = vrsqrt.pop %v742
        %s744 = vtos %v743
        %v745 = vstv %s744
        %v746 = vmul.f32 %v745, %v610
        %v747 = vmul.f32 %v745, %v611
        %749 = vset.pattern.permute.xlu0 0
        %750 = vperm.xlu0 %749, %v746
        %v751 = vpop.permute.xlu0 %750
        %754 = vset.pattern.permute.xlu0 0
        %755 = vperm.xlu0 %754, %v747
        %v756 = vpop.permute.xlu0 %755
        %v758 = vmul.f32 %v697, %v751
        %v759 = vmul.f32 %v698, %v751
        %v760 = vmul.f32 %v699, %v751
        %v761 = vmul.f32 %v700, %v751
        %v762 = vmul.f32 %v701, %v756
        %v763 = vmul.f32 %v702, %v756
        %v764 = vmul.f32 %v703, %v756
        %v765 = vmul.f32 %v704, %v756
        %767 = vset.pattern.permute.xlu0 0
        %768 = vperm.xlu0 %767, %v612
        %v769 = vpop.permute.xlu0 %768
        %772 = vset.pattern.permute.xlu0 0
        %773 = vperm.xlu0 %772, %v613
        %v774 = vpop.permute.xlu0 %773
        %v776 = vadd.f32 %v758, %v769
        %v777 = vadd.f32 %v759, %v769
        %v778 = vadd.f32 %v760, %v769
        %v779 = vadd.f32 %v761, %v769
        %v780 = vadd.f32 %v762, %v774
        %v781 = vadd.f32 %v763, %v774
        %v782 = vadd.f32 %v764, %v774
        %v783 = vadd.f32 %v765, %v774
        %v784 = vmul.f32 %v776, 0.5
        %v785 = vmul.f32 %v777, 0.5
        %v786 = vmul.f32 %v778, 0.5
        %v787 = vmul.f32 %v779, 0.5
        %v788 = vmul.f32 %v780, 0.5
        %v789 = vmul.f32 %v781, 0.5
        %v790 = vmul.f32 %v782, 0.5
        %v791 = vmul.f32 %v783, 0.5
        %v792 = vmul.f32 %v776, 0.70710677
        %v793 = vmul.f32 %v777, 0.70710677
        %v794 = vmul.f32 %v778, 0.70710677
        %v795 = vmul.f32 %v779, 0.70710677
        %v796 = vmul.f32 %v780, 0.70710677
        %v797 = vmul.f32 %v781, 0.70710677
        %v798 = vmul.f32 %v782, 0.70710677
        %v799 = vmul.f32 %v783, 0.70710677
        %v800 = verf.f32.pop %v792
        %v801 = verf.f32.pop %v793
        %v802 = verf.f32.pop %v794
        %v803 = verf.f32.pop %v795
        %v804 = verf.f32.pop %v796
        %v805 = verf.f32.pop %v797
        %v806 = verf.f32.pop %v798
        %v807 = verf.f32.pop %v799
        %v808 = vadd.f32 %v800, 1.0
        %v809 = vadd.f32 %v801, 1.0
        %v810 = vadd.f32 %v802, 1.0
        %v811 = vadd.f32 %v803, 1.0
        %v812 = vadd.f32 %v804, 1.0
        %v813 = vadd.f32 %v805, 1.0
        %v814 = vadd.f32 %v806, 1.0
        %v815 = vadd.f32 %v807, 1.0
        %v816 = vmul.f32 %v784, %v808
        %v817 = vmul.f32 %v785, %v809
        %v818 = vmul.f32 %v786, %v810
        %v819 = vmul.f32 %v787, %v811
        %v820 = vmul.f32 %v788, %v812
        %v821 = vmul.f32 %v789, %v813
        %v822 = vmul.f32 %v790, %v814
        %v823 = vmul.f32 %v791, %v815
        %v824 = vmul.f32 %v816, %v646
        %v825 = vmul.f32 %v817, %v647
        %v826 = vmul.f32 %v818, %v648
        %v827 = vmul.f32 %v819, %v649
        %v828 = vmul.f32 %v820, %v646
        %v829 = vmul.f32 %v821, %v647
        %v830 = vmul.f32 %v822, %v648
        %v831 = vmul.f32 %v823, %v649
        %v832 = vpack.c.bf16 %v828, %v824
        %v833 = vpack.c.bf16 %v829, %v825
        %v834 = vpack.c.bf16 %v830, %v826
        %v835 = vpack.c.bf16 %v831, %v827
        %840 = vrot.lane.b32.xlu0 %v832, 127
        %v841 = vpop.permute.xlu0 %840
        %842 = vrot.lane.b32.xlu0 %v833, 127
        %v843 = vpop.permute.xlu0 %842
        %844 = vrot.lane.b32.xlu0 %v834, 127
        %v845 = vpop.permute.xlu0 %844
        %846 = vrot.lane.b32.xlu0 %v835, 127
        %v847 = vpop.permute.xlu0 %846
        %v848 = vsel %vm367, %v841, %v843
        %v849 = vsel %vm367, %v843, %v845
        %v850 = vsel %vm367, %v845, %v847
        %854 = vrot.lane.b32.xlu0 %v832, 126
        %v855 = vpop.permute.xlu0 %854
        %856 = vrot.lane.b32.xlu0 %v833, 126
        %v857 = vpop.permute.xlu0 %856
        %858 = vrot.lane.b32.xlu0 %v834, 126
        %v859 = vpop.permute.xlu0 %858
        %860 = vrot.lane.b32.xlu0 %v835, 126
        %v861 = vpop.permute.xlu0 %860
        %v862 = vsel %vm386, %v855, %v857
        %v863 = vsel %vm386, %v857, %v859
        %v864 = vsel %vm386, %v859, %v861
        %868 = vrot.lane.b32.xlu0 %v832, 108
        %v869 = vpop.permute.xlu0 %868
        %870 = vrot.lane.b32.xlu0 %v833, 108
        %v871 = vpop.permute.xlu0 %870
        %872 = vrot.lane.b32.xlu0 %v834, 108
        %v873 = vpop.permute.xlu0 %872
        %874 = vrot.lane.b32.xlu0 %v835, 108
        %v875 = vpop.permute.xlu0 %874
        %v876 = vsel %vm405, %v869, %v871
        %v877 = vsel %vm405, %v871, %v873
        %v878 = vsel %vm405, %v873, %v875
        %882 = vrot.lane.b32.xlu0 %v832, 107
        %v883 = vpop.permute.xlu0 %882
        %884 = vrot.lane.b32.xlu0 %v833, 107
        %v885 = vpop.permute.xlu0 %884
        %886 = vrot.lane.b32.xlu0 %v834, 107
        %v887 = vpop.permute.xlu0 %886
        %888 = vrot.lane.b32.xlu0 %v835, 107
        %v889 = vpop.permute.xlu0 %888
        %v890 = vsel %vm424, %v883, %v885
        %v891 = vsel %vm424, %v885, %v887
        %v892 = vsel %vm424, %v887, %v889
        %896 = vrot.lane.b32.xlu0 %v832, 106
        %v897 = vpop.permute.xlu0 %896
        %898 = vrot.lane.b32.xlu0 %v833, 106
        %v899 = vpop.permute.xlu0 %898
        %900 = vrot.lane.b32.xlu0 %v834, 106
        %v901 = vpop.permute.xlu0 %900
        %902 = vrot.lane.b32.xlu0 %v835, 106
        %v903 = vpop.permute.xlu0 %902
        %v904 = vsel %vm443, %v897, %v899
        %v905 = vsel %vm443, %v899, %v901
        %v906 = vsel %vm443, %v901, %v903
        %910 = vrot.lane.b32.xlu0 %v832, 88
        %v911 = vpop.permute.xlu0 %910
        %912 = vrot.lane.b32.xlu0 %v833, 88
        %v913 = vpop.permute.xlu0 %912
        %914 = vrot.lane.b32.xlu0 %v834, 88
        %v915 = vpop.permute.xlu0 %914
        %916 = vrot.lane.b32.xlu0 %v835, 88
        %v917 = vpop.permute.xlu0 %916
        %v918 = vsel %vm462, %v911, %v913
        %v919 = vsel %vm462, %v913, %v915
        %v920 = vsel %vm462, %v915, %v917
        %924 = vrot.lane.b32.xlu0 %v832, 87
        %v925 = vpop.permute.xlu0 %924
        %926 = vrot.lane.b32.xlu0 %v833, 87
        %v927 = vpop.permute.xlu0 %926
        %928 = vrot.lane.b32.xlu0 %v834, 87
        %v929 = vpop.permute.xlu0 %928
        %930 = vrot.lane.b32.xlu0 %v835, 87
        %v931 = vpop.permute.xlu0 %930
        %v932 = vsel %vm481, %v925, %v927
        %v933 = vsel %vm481, %v927, %v929
        %v934 = vsel %vm481, %v929, %v931
        %938 = vrot.lane.b32.xlu0 %v832, 86
        %v939 = vpop.permute.xlu0 %938
        %940 = vrot.lane.b32.xlu0 %v833, 86
        %v941 = vpop.permute.xlu0 %940
        %942 = vrot.lane.b32.xlu0 %v834, 86
        %v943 = vpop.permute.xlu0 %942
        %944 = vrot.lane.b32.xlu0 %v835, 86
        %v945 = vpop.permute.xlu0 %944
        %v946 = vsel %vm500, %v939, %v941
        %v947 = vsel %vm500, %v941, %v943
        %v948 = vsel %vm500, %v943, %v945
        %v952 = vld [vmem:[%s2] sm:$0xff]
        %v954 = vunpack.c.l.b16 %v952
        %v955 = vunpack.c.h.b16 %v952
        %v956 = vpack.c.b16 %v954, %v954
        %v957 = vpack.c.b16 %v955, %v955
        %v960 = vsel %vm520, %v957, 0
        %962 = vmatprep.subr.bf16.mxu0 %v833
        %963 = vmatpush1.bf16.msra.mxu0 %v832
        %964 = vmatprep.subr.bf16.mxu0 %v849
        %965 = vmatpush1.bf16.msra.mxu0 %v848
        %966 = vmatprep.subr.bf16.mxu0 %v863
        %967 = vmatpush1.bf16.msra.mxu0 %v862
        %968 = vmatprep.subr.bf16.mxu0 %v877
        %969 = vmatpush1.bf16.msra.mxu0 %v876
        %970 = vmatprep.subr.bf16.mxu0 %v891
        %971 = vmatpush1.bf16.msra.mxu0 %v890
        %972 = vmatprep.subr.bf16.mxu0 %v905
        %973 = vmatpush1.bf16.msra.mxu0 %v904
        %974 = vmatprep.subr.bf16.mxu0 %v919
        %975 = vmatpush1.bf16.msra.mxu0 %v918
        %976 = vmatprep.subr.bf16.mxu0 %v933
        %977 = vmatpush1.bf16.msra.mxu0 %v932
        %978 = vmatprep.subr.bf16.mxu0 %v947
        %979 = vmatpush1.bf16.msra.mxu0 %v946
        %980 = vmatprep.subr.bf16.mxu0 0
        %981 = vmatpush1.bf16.msra.mxu0 0
        %982 = vmatprep.subr.bf16.mxu0 0
        %983 = vmatpush1.bf16.msra.mxu0 0
        %984 = vmatprep.subr.bf16.mxu0 0
        %985 = vmatpush1.bf16.msra.mxu0 0
        %986 = vmatprep.subr.bf16.mxu0 0
        %987 = vmatpush1.bf16.msra.mxu0 0
        %988 = vmatprep.subr.bf16.mxu0 0
        %989 = vmatpush1.bf16.msra.mxu0 0
        %990 = vmatprep.subr.bf16.mxu0 0
        %991 = vmatpush1.bf16.msra.mxu0 0
        %992 = vmatprep.subr.bf16.mxu0 0
        %993 = vmatpush1.bf16.msra.mxu0 0
        %994 = vmatprep.mubr.bf16.mxu0 %v960
        %995 = vmatmul.mubr.bf16.gmra.mrb[0].mxu0 %v956
        %v996 = vpop.f32.mrb[0].mxu0
        %v997 = vadd.f32 0.0, %v996
        %v998 = vpop.f32.mrb[0].mxu0
        %v999 = vadd.f32 0.0, %v998
        %v1000 = vpop.f32.mrb[0].mxu0
        %v1001 = vpop.f32.mrb[0].mxu0
        %1002 = vdwg.mxu0
        %1003 = vmatprep.subr.bf16.mxu0 0
        %1004 = vmatpush1.bf16.msra.mxu0 %v834
        %1005 = vmatprep.subr.bf16.mxu0 0
        %1006 = vmatpush1.bf16.msra.mxu0 %v850
        %1007 = vmatprep.subr.bf16.mxu0 0
        %1008 = vmatpush1.bf16.msra.mxu0 %v864
        %1009 = vmatprep.subr.bf16.mxu0 0
        %1010 = vmatpush1.bf16.msra.mxu0 %v878
        %1011 = vmatprep.subr.bf16.mxu0 0
        %1012 = vmatpush1.bf16.msra.mxu0 %v892
        %1013 = vmatprep.subr.bf16.mxu0 0
        %1014 = vmatpush1.bf16.msra.mxu0 %v906
        %1015 = vmatprep.subr.bf16.mxu0 0
        %1016 = vmatpush1.bf16.msra.mxu0 %v920
        %1017 = vmatprep.subr.bf16.mxu0 0
        %1018 = vmatpush1.bf16.msra.mxu0 %v934
        %1019 = vmatprep.subr.bf16.mxu0 0
        %1020 = vmatpush1.bf16.msra.mxu0 %v948
        %1021 = vmatprep.subr.bf16.mxu0 0
        %1022 = vmatpush1.bf16.msra.mxu0 0
        %1023 = vmatprep.subr.bf16.mxu0 0
        %1024 = vmatpush1.bf16.msra.mxu0 0
        %1025 = vmatprep.subr.bf16.mxu0 0
        %1026 = vmatpush1.bf16.msra.mxu0 0
        %1027 = vmatprep.subr.bf16.mxu0 0
        %1028 = vmatpush1.bf16.msra.mxu0 0
        %1029 = vmatprep.subr.bf16.mxu0 0
        %1030 = vmatpush1.bf16.msra.mxu0 0
        %1031 = vmatprep.subr.bf16.mxu0 0
        %1032 = vmatpush1.bf16.msra.mxu0 0
        %1033 = vmatprep.subr.bf16.mxu0 0
        %1034 = vmatpush1.bf16.msra.mxu0 0
        %1035 = vmatprep.mubr.bf16.mxu0 %v960
        %1036 = vmatmul.mubr.bf16.gmra.mrb[0].mxu0 %v956
        %v1037 = vpop.f32.mrb[0].mxu0
        %v1038 = vadd.f32 0.0, %v1037
        %v1039 = vpop.f32.mrb[0].mxu0
        %v1040 = vpop.f32.mrb[0].mxu0
        %v1041 = vpop.f32.mrb[0].mxu0
        %1042 = vdwg.mxu0
        %v1043 = vld [vmem:[%s5] sm:$0xff]
        %v1044 = vld [vmem:[%s6] sm:$0xff]
        %1045 = vrot.lane.b32.xlu0 %v618, 86
        %v1046 = vpop.permute.xlu0 %1045
        %1047 = vrot.lane.b32.xlu0 %v622, 86
        %v1048 = vpop.permute.xlu0 %1047
        %1049 = vrot.lane.b32.xlu0 %v626, 86
        %v1050 = vpop.permute.xlu0 %1049
        %1051 = vrot.lane.b32.xlu0 %v630, 86
        %v1052 = vpop.permute.xlu0 %1051
        %vm1053 = vcmask 703488
        %v1054 = vsel %vm1053, %v1046, %v1048
        %v1055 = vsel %vm1053, %v1048, %v1050
        %v1056 = vsel %vm1053, %v1050, %v1052
        %v1060 = vmul.f32 %v997, %v1054
        %v1061 = vmul.f32 %v999, %v1055
        %v1062 = vmul.f32 %v1038, %v1056
        %v1063 = vadd.f32 %v1060, %v1061
        %v1064 = vadd.f32 %v1063, %v1062
        %1065 = vadd.xlane.f32.xlu0 %v1064
        %v1066 = vpop.xlane.xlu0 %1065
        %v1067 = vsel %vm672, %v1066, 0.0
        %1068 = vadd.xlane.f32.xlu0 %v1067
        %v1069 = vpop.xlane.xlu0 %1068
        %v1070 = vrot.slane %v1069, 4
        %v1071 = vadd.f32 %v1069, %v1070
        %v1072 = vrot.slane %v1071, 2
        %v1073 = vadd.f32 %v1071, %v1072
        %v1074 = vrot.slane %v1073, 1
        %v1075 = vadd.f32 %v1073, %v1074
        %s1076 = vtos %v1075
        %v1077 = vrcp.pop 2048.0
        %s1078 = vtos %v1077
        %s1079 = smul.f32 %s1076, %s1078
        %v1080 = vstv %s1079
        %v1081 = vsub.f32 %v997, %v1080
        %v1082 = vsub.f32 %v999, %v1080
        %v1083 = vsub.f32 %v1038, %v1080
        %v1084 = vmul.f32 %v1081, %v1054
        %v1085 = vmul.f32 %v1082, %v1055
        %v1086 = vmul.f32 %v1083, %v1056
        %v1087 = vmul.f32 %v1084, %v1084
        %v1088 = vmul.f32 %v1085, %v1085
        %v1089 = vmul.f32 %v1086, %v1086
        %v1090 = vadd.f32 %v1087, %v1088
        %v1091 = vadd.f32 %v1090, %v1089
        %1092 = vadd.xlane.f32.xlu0 %v1091
        %v1093 = vpop.xlane.xlu0 %1092
        %v1094 = vsel %vm672, %v1093, 0.0
        %1095 = vadd.xlane.f32.xlu0 %v1094
        %v1096 = vpop.xlane.xlu0 %1095
        %v1097 = vrot.slane %v1096, 4
        %v1098 = vadd.f32 %v1096, %v1097
        %v1099 = vrot.slane %v1098, 2
        %v1100 = vadd.f32 %v1098, %v1099
        %v1101 = vrot.slane %v1100, 1
        %v1102 = vadd.f32 %v1100, %v1101
        %s1103 = vtos %v1102
        %v1104 = vrcp.pop 2048.0
        %s1105 = vtos %v1104
        %s1106 = smul.f32 %s1103, %s1105
        %s1107 = smax.f32 %s1106, 0.0
        %s1108 = sadd.f32 %s1107, 1e-05
        %v1109 = vstv %s1108
        %v1110 = vrsqrt.pop %v1109
        %s1111 = vtos %v1110
        %v1112 = vstv %s1111
        %v1113 = vmul.f32 %v1112, %v1043
        %1115 = vset.pattern.permute.xlu0 0
        %1116 = vperm.xlu0 %1115, %v1113
        %v1117 = vpop.permute.xlu0 %1116
        %v1119 = vmul.f32 %v1084, %v1117
        %v1120 = vmul.f32 %v1085, %v1117
        %v1121 = vmul.f32 %v1086, %v1117
        %1123 = vset.pattern.permute.xlu0 0
        %1124 = vperm.xlu0 %1123, %v1044
        %v1125 = vpop.permute.xlu0 %1124
        %v1127 = vadd.f32 %v1119, %v1125
        %v1128 = vadd.f32 %v1120, %v1125
        %v1129 = vadd.f32 %v1121, %v1125
        %1130 = vst [vmem:[%s323] sm:$0xff] %v1127
        %1131 = vst [vmem:[%s323 + $0x8] sm:$0xff] %v1128
        %1132 = vst [vmem:[%s323 + $0x10] sm:$0xff] %v1129
        %s1133 = sand.u32 %s206, 1
        %s1134 = scalar_lea.sflag [#allocation4], %s1133
        %s1135 = sand.u32 %s206, 1
        %s1136 = smul.addr %s1135, 24
        %s1137 = scalar_lea.vmem [#allocation5], %s1136
        // Predicated region
        $region57: #{tpu_custom_call.1} parent=51 // pred_check
          %p1138 = pneg %p216
        $region58: #{tpu_custom_call.1} parent=51 // pred_check_branch
          %1140 = sbr.rel (%p1138) target = $region60
        $region59: #{tpu_custom_call.1} parent=51 // pred_region
          %s1142 = ssub.s32 384, 384
          %1143 = vsyncadd %s1134, %s1142
          %s1144 = smul.addr %s25, 3
          %s1145 = smul.addr %s1144, 128
          %s1146 = scalar_lea.hbm %s8, %s1145
          %s1148 = sshll.u32 %s1137, 4
          %s1149 = int_to_ptr.vmem [resolvable:$true] %s1148
          %1151 = dma.vmem_to_hbm [thread:$0]  %s1149, 384, %s1146, %s1134
        $region60: #{tpu_custom_call.1} parent=51 // pred_fallthru
          _
      $region52: #{tpu_custom_call.1} parent=5 // pred_fallthru
        _
      %p1152 = scmp.le.s32.totalorder 2, %s20
      // Predicated region
      $region61: #{tpu_custom_call.1} parent=5 // pred_check
        %p1153 = pneg %p1152
      $region62: #{tpu_custom_call.1} parent=5 // pred_check_branch
        %1155 = sbr.rel (%p1153) target = $region64
      $region63: #{tpu_custom_call.1} parent=5 // pred_region
        %s1156 = ssub.s32 %s20, 2
        // Predicated region
        $region65: #{tpu_custom_call.1} parent=63 // pred_check
          %p1157 = pneg %p222
        $region66: #{tpu_custom_call.1} parent=63 // pred_check_branch
          %1159 = sbr.rel (%p1157) target = $region68
        $region67: #{tpu_custom_call.1} parent=63 // pred_region
          %s1160 = sand.u32 %s207, 1
          %s1161 = scalar_lea.sflag [#allocation4], %s1160
          %s1162 = sand.u32 %s207, 1
          %s1163 = smul.addr %s1162, 24
          %s1164 = scalar_lea.vmem [#allocation5], %s1163
          %1165 = dma.done %s1161, 384
        $region68: #{tpu_custom_call.1} parent=63 // pred_fallthru
          _
      $region64: #{tpu_custom_call.1} parent=5 // pred_fallthru
        _
    $region6: #{tpu_custom_call.1} parent=1 // loop_footer
      %s24 = sadd.s32 1, %s20
    $region7: #{tpu_custom_call.1} parent=1 // loop_footer_branch
      %19 = sbr.rel target = $region3
    $region8: #{tpu_custom_call.1} parent=1 // loop_exit
      _
    %1166 = vsyncpa [#allocation3], 1
    %s1167 = scalar_lea.sflag [#allocation3], 1
    %1168 = vsyncpa %s1167, 1
    %1169 = vsyncpa [#allocation4], 1
    %s1170 = scalar_lea.sflag [#allocation4], 1
    %1171 = vsyncpa %s1170, 1

</llo_original>
